<compile_context>
chip_gen: v7x
topology: tpu7x:2x2x1
jax: 0.10.0
libtpu: 0.0.40
codegen_flags: <defaults>
</compile_context>

<pallas_src>
import jax
import jax.numpy as jnp
from jax.experimental import pallas as pl
from jax.experimental.pallas import tpu as pltpu


def _class_head_kernel(x_ref, w_ref, b_ref, o_ref):
    # x_ref: (Cin, THW)   -- NCHW slab, HW on the 128-lane axis
    # w_ref: (Cout, Cin)  -- 1x1 conv weight
    # b_ref: (Cout, 1)    -- bias, broadcasts across lanes
    # o_ref: (Cout, THW)
    acc = jnp.dot(w_ref[...], x_ref[...], preferred_element_type=jnp.float32)
    o_ref[...] = (acc + b_ref[...]).astype(o_ref.dtype)


def _round_up(x, m):
    return (x + m - 1) // m * m


def class_head_forward(x_nchw, weight, bias, num_anchors):
    """x_nchw: (B, Cin, H, W); weight: (Cout, Cin, 1, 1); bias: (Cout,)."""
    B, Cin, H, W = x_nchw.shape
    Cout = weight.shape[0]
    assert Cout == num_anchors * 2

    HW = H * W

    # HW lives on the 128-lane axis.  Big tiles (~2 MiB of x per step) keep
    # the kernel HBM-bound rather than grid-overhead-bound; THW is always a
    # multiple of 128 so the partial last block is legal.
    THW = min(16384, _round_up(HW, 128))
    # v7x megacore: make sure there are >= 2 grid steps in total so both
    # TensorCores get work (only shrink if a single tile would cover it all).
    while B * pl.cdiv(HW, THW) < 2 and THW > 128:
        THW = _round_up(pl.cdiv(THW, 2), 128)

    n_hw_tiles = pl.cdiv(HW, THW)
    grid = (B, n_hw_tiles)

    # NCHW -> (B, Cin, HW) is a contiguous reshape: zero data movement.
    # No jnp.pad: Pallas masks the partial last HW block itself.
    x_flat = x_nchw.reshape(B, Cin, HW)

    w2d = weight.reshape(Cout, Cin)   # (Cout, Cin)
    b2d = bias.reshape(Cout, 1)       # (Cout, 1) broadcasts over HW lanes

    itemsize = jnp.dtype(x_nchw.dtype).itemsize
    cost = pl.CostEstimate(
        flops=2 * B * HW * Cin * Cout,
        transcendentals=0,
        bytes_accessed=(B * Cin * HW + Cin * Cout + Cout
                        + B * Cout * HW) * itemsize,
    )

    out_bcl = pl.pallas_call(
        _class_head_kernel,
        out_shape=jax.ShapeDtypeStruct((B, Cout, HW), x_nchw.dtype),
        grid_spec=pltpu.PrefetchScalarGridSpec(
            num_scalar_prefetch=0,
            grid=grid,
            in_specs=[
                # x: (batch squeezed, full Cin, lane-dense HW tile)
                pl.BlockSpec((None, Cin, THW), lambda b, j: (b, 0, j)),
                # weight / bias are tiny; keep resident, same block every step
                pl.BlockSpec((Cout, Cin), lambda b, j: (0, 0)),
                pl.BlockSpec((Cout, 1), lambda b, j: (0, 0)),
            ],
            out_specs=pl.BlockSpec((None, Cout, THW), lambda b, j: (b, 0, j)),
        ),
        compiler_params=pltpu.CompilerParams(
            dimension_semantics=("parallel", "parallel")),
        cost_estimate=cost,
    )(x_flat, w2d, b2d)

    # Cheap layout fixup on the SMALL output (Cout = 2*num_anchors wide):
    # (B, Cout, HW) -> (B, HW, Cout) == permute(0,2,3,1), then view(B, -1, 2).
    out = jnp.transpose(out_bcl, (0, 2, 1))
    return out.reshape(B, HW * num_anchors, 2)


if __name__ == "__main__":
    # Small shapes consistent with the module (inchannels, num_anchors configurable).
    B, Cin, Hs, Ws = 2, 32, 16, 16
    num_anchors = 3
    Cout = num_anchors * 2

    key = jax.random.PRNGKey(0)
    kx, kw, kb = jax.random.split(key, 3)

    x = jax.random.normal(kx, (B, Cin, Hs, Ws), dtype=jnp.float32)
    # Deterministic synthetic parameters (conv1x1 weight/bias shapes from __init__).
    weight = jax.random.normal(kw, (Cout, Cin, 1, 1), dtype=jnp.float32) * 0.05
    bias = jax.random.normal(kb, (Cout,), dtype=jnp.float32) * 0.01

    out = class_head_forward(x, weight, bias, num_anchors)
    out = jax.block_until_ready(out)

    # Pure-JAX reference of the same forward pass (1x1 conv == channel matmul).
    ref = jnp.einsum("bchw,oc->bhwo", x, weight.reshape(Cout, Cin)) + bias
    ref = ref.reshape(B, Hs * Ws * num_anchors, 2)

    assert out.shape == (B, Hs * Ws * num_anchors, 2), out.shape
    assert jnp.allclose(out, ref, atol=1e-4, rtol=1e-4)

    print("KERNEL_OK")
</pallas_src>

<mosaic_0001>
module attributes {stable_mosaic.version = 11 : i64} {
  func.func @_class_head_kernel(%arg0: i32, %arg1: i32, %arg2: memref<1x32x256xf32, #tpu.memory_space<vmem>>, %arg3: memref<6x32xf32, #tpu.memory_space<vmem>>, %arg4: memref<6x1xf32, #tpu.memory_space<vmem>>, %arg5: memref<1x6x256xf32, #tpu.memory_space<vmem>>) attributes {dimension_semantics = [#tpu.dimension_semantics<parallel>, #tpu.dimension_semantics<parallel>], iteration_bounds = array<i64: 2, 1>, scalar_prefetch = 0 : i64, scratch_operands = 0 : i64, tpu.core_type = #tpu.core_type<tc>, window_params = [{transform_indices = @transform_0, window_bounds = array<i64: 1, 32, 256>}, {pipeline_mode = #tpu.pipeline_mode<synchronous>, transform_indices = @transform_1, window_bounds = array<i64: 6, 32>}, {pipeline_mode = #tpu.pipeline_mode<synchronous>, transform_indices = @transform_2, window_bounds = array<i64: 6, 1>}, {transform_indices = @transform_3, window_bounds = array<i64: 1, 6, 256>}]} {
    %c0 = arith.constant 0 : index
    %c0_0 = arith.constant 0 : index
    %0 = vector.load %arg3[%c0, %c0_0] : memref<6x32xf32, #tpu.memory_space<vmem>>, vector<6x32xf32>
    %c0_1 = arith.constant 0 : index
    %c0_2 = arith.constant 0 : index
    %c0_3 = arith.constant 0 : index
    %1 = vector.load %arg2[%c0_1, %c0_2, %c0_3] : memref<1x32x256xf32, #tpu.memory_space<vmem>>, vector<1x32x256xf32>
    %2 = vector.shape_cast %1 : vector<1x32x256xf32> to vector<32x256xf32>
    %cst = arith.constant dense<0.000000e+00> : vector<6x256xf32>
    %3 = tpu.matmul %0, %2, %cst {dimension_numbers = #tpu.dot_dimension_numbers<[1], [0], [0], [1], [0, 0, 1, 1], [], []>} : vector<6x32xf32>, vector<32x256xf32>, vector<6x256xf32> -> vector<6x256xf32>
    %c0_4 = arith.constant 0 : index
    %c0_5 = arith.constant 0 : index
    %4 = vector.load %arg4[%c0_4, %c0_5] : memref<6x1xf32, #tpu.memory_space<vmem>>, vector<6x1xf32>
    %5 = vector.broadcast %4 : vector<6x1xf32> to vector<6x256xf32>
    %6 = arith.addf %3, %5 : vector<6x256xf32>
    %c0_6 = arith.constant 0 : index
    %c0_7 = arith.constant 0 : index
    %c0_8 = arith.constant 0 : index
    %7 = vector.load %arg5[%c0_6, %c0_7, %c0_8] : memref<1x6x256xf32, #tpu.memory_space<vmem>>, vector<1x6x256xf32>
    %8 = vector.shape_cast %7 : vector<1x6x256xf32> to vector<6x256xf32>
    %9 = vector.shape_cast %6 : vector<6x256xf32> to vector<1x6x256xf32>
    tpu.vector_store %arg5[%c0_6, %c0_7, %c0_8], %9 {strides = array<i32>} : memref<1x6x256xf32, #tpu.memory_space<vmem>>, vector<1x6x256xf32>,
    return
  }
  func.func @transform_0(%arg0: i32, %arg1: i32) -> (i32, i32, i32) {
    %c0_i32 = arith.constant 0 : i32
    %c0_i32_0 = arith.constant 0 : i32
    return %arg0, %c0_i32, %arg1 : i32, i32, i32
  }
  func.func @transform_1(%arg0: i32, %arg1: i32) -> (i32, i32) {
    %c0_i32 = arith.constant 0 : i32
    %c0_i32_0 = arith.constant 0 : i32
    %c0_i32_1 = arith.constant 0 : i32
    return %c0_i32, %c0_i32_0 : i32, i32
  }
  func.func @transform_2(%arg0: i32, %arg1: i32) -> (i32, i32) {
    %c0_i32 = arith.constant 0 : i32
    %c0_i32_0 = arith.constant 0 : i32
    %c0_i32_1 = arith.constant 0 : i32
    return %c0_i32, %c0_i32_0 : i32, i32
  }
  func.func @transform_3(%arg0: i32, %arg1: i32) -> (i32, i32, i32) {
    %c0_i32 = arith.constant 0 : i32
    %c0_i32_0 = arith.constant 0 : i32
    return %arg0, %c0_i32, %arg1 : i32, i32, i32
  }
}

</mosaic_0001>

<llo_original>
// kernel: tpu_custom_call.1
$region0: #{tpu_custom_call.1}
  #allocation0 [shape = 'u32[]', space=smem, size = 0x4, offset = 0x4, fixed_abs, tag = 'smem constant byte address 0x4 - core index']
  #allocation1 [shape = 'u32[144,128]{1,0:T(1,128)}', space=vmem, size = 0x12000, scoped, tag = 'internal scratch']
  %s0 = inlined_call_operand.hbm [shape: f32[2,32,256], index: 0, kind: input, shape index: {}]
  %s1 = inlined_call_operand.vmem [shape: f32[6,32], index: 1, kind: input, shape index: {}]
  %s2 = inlined_call_operand.vmem [shape: f32[6,1], index: 2, kind: input, shape index: {}]
  %s3 = inlined_call_operand.vmem [shape: f32[2,6,256], index: 3, kind: output, shape index: {}]
  %s4 = sld [smem:[#allocation0]]
  $region49: #{tpu_custom_call.1} parent=0
    _
  %s6 = ssub.s32 1, %s4
  %s7 = scalar_select 0, %s6, %s4
  $region1: #{tpu_custom_call.1} parent=0
    #allocation2 [shape = 'u8[65536]{0}', space=vmem, size = 0x10000, scoped, tag = 'input window, operand 0']
    #allocation3 [shape = 's32[2]{0}', space=sflag, size = 0x8, scoped, tag = 'scoped memory for tpu_custom_call.1']
    %8 = vsyncpa [#allocation3], 0
    %s9 = scalar_lea.sflag [#allocation3], 1
    %10 = vsyncpa %s9, 0
    loop: start=0, step=1, limit=4
    $region2: #{tpu_custom_call.1} parent=1 // loop_pre_header
      _
    $region3: #{tpu_custom_call.1} parent=1 // loop_header
      %s12 = sphi 0, %s16
      %p13 = scmp.ge.s32.totalorder %s12, 4
      %s19 = sphi 0, %s31
      %s20 = sphi 0, %s27
      %s21 = sphi 0, %s19
      %s22 = sphi 0, %s20
      %s23 = sphi 0, %s21
      %s24 = sphi 0, %s22
      %s36 = sphi 0, %s38
      %s39 = sphi 0, %s36
      %s40 = sphi 0, %s39
      %s56 = sphi 0, %s40
      %s60 = sphi 0, %s60
      %s62 = sphi 0, %s60
      %s63 = sphi 0, %s62
      %s77 = sphi 0, %s63
      %s81 = sphi 0, %s81
      %s83 = sphi 0, %s81
      %s84 = sphi 0, %s83
      %s98 = sphi 0, %s84
      %s106 = sphi 0, %s108
      %s109 = sphi 0, %s106
      %s110 = sphi 0, %s109
      %s126 = sphi 0, %s110
    $region4: #{tpu_custom_call.1} parent=1 // loop_header_branch
      %15 = sbr.rel (%p13) target = $region8
    $region5: #{tpu_custom_call.1} parent=1 // loop_body
      %s17 = ssub.s32 %s12, 1
      %s18 = ssub.s32 %s12, 2
      %s25 = sadd.s32 1, %s20
      %p26 = scmp.ge.s32.totalorder %s25, 1
      %s27 = scalar_select %p26, 0, %s25
      %s28 = sadd.s32 1, %s19
      %s29 = scalar_select %p26, %s28, %s19
      %p30 = scmp.ge.s32.totalorder %s29, 2
      %s31 = scalar_select %p30, 0, %s29
      %s32 = ssub.s32 %s19, %s31
      %s33 = ssub.s32 %s20, %s27
      %s34 = sor.u32 %s32, %s33
      %p35 = scmp.eq.s32.totalorder %s34, 0
      %s37 = sadd.s32 %s36, 1
      %s38 = scalar_select %p35, %s36, %s37
      %p41 = pneg %p35
      %p42 = scmp.eq.s32.totalorder %s12, 1
      %p43 = por %p41, %p42
      %p44 = scmp.ne.s32.totalorder %s36, %s39
      %p45 = scmp.eq.s32.totalorder %s12, 0
      %p46 = por %p44, %p45
      %p47 = scmp.ne.s32.totalorder %s36, %s39
      %p48 = scmp.eq.s32.totalorder %s17, 1
      %p49 = por %p47, %p48
      %p50 = scmp.ne.s32.totalorder %s39, %s40
      %p51 = scmp.eq.s32.totalorder %s17, 0
      %p52 = por %p50, %p51
      %p53 = scmp.ne.s32.totalorder %s39, %s40
      %p54 = scmp.eq.s32.totalorder %s18, 1
      %p55 = por %p53, %p54
      %p57 = scmp.ne.s32.totalorder %s40, %s56
      %p58 = scmp.eq.s32.totalorder %s18, 0
      %p59 = por %p57, %p58
      %s61 = sadd.s32 %s60, 1
      %p64 = scmp.eq.s32.totalorder %s12, 1
      %p65 = scmp.ne.s32.totalorder %s60, %s62
      %p66 = scmp.eq.s32.totalorder %s12, 0
      %p67 = por %p65, %p66
      %p68 = scmp.ne.s32.totalorder %s60, %s62
      %p69 = scmp.eq.s32.totalorder %s17, 1
      %p70 = por %p68, %p69
      %p71 = scmp.ne.s32.totalorder %s62, %s63
      %p72 = scmp.eq.s32.totalorder %s17, 0
      %p73 = por %p71, %p72
      %p74 = scmp.ne.s32.totalorder %s62, %s63
      %p75 = scmp.eq.s32.totalorder %s18, 1
      %p76 = por %p74, %p75
      %p78 = scmp.ne.s32.totalorder %s63, %s77
      %p79 = scmp.eq.s32.totalorder %s18, 0
      %p80 = por %p78, %p79
      %s82 = sadd.s32 %s81, 1
      %p85 = scmp.eq.s32.totalorder %s12, 1
      %p86 = scmp.ne.s32.totalorder %s81, %s83
      %p87 = scmp.eq.s32.totalorder %s12, 0
      %p88 = por %p86, %p87
      %p89 = scmp.ne.s32.totalorder %s81, %s83
      %p90 = scmp.eq.s32.totalorder %s17, 1
      %p91 = por %p89, %p90
      %p92 = scmp.ne.s32.totalorder %s83, %s84
      %p93 = scmp.eq.s32.totalorder %s17, 0
      %p94 = por %p92, %p93
      %p95 = scmp.ne.s32.totalorder %s83, %s84
      %p96 = scmp.eq.s32.totalorder %s18, 1
      %p97 = por %p95, %p96
      %p99 = scmp.ne.s32.totalorder %s84, %s98
      %p100 = scmp.eq.s32.totalorder %s18, 0
      %p101 = por %p99, %p100
      %s102 = ssub.s32 %s19, %s31
      %s103 = ssub.s32 %s20, %s27
      %s104 = sor.u32 %s102, %s103
      %p105 = scmp.eq.s32.totalorder %s104, 0
      %s107 = sadd.s32 %s106, 1
      %s108 = scalar_select %p105, %s106, %s107
      %p111 = pneg %p105
      %p112 = scmp.eq.s32.totalorder %s12, 1
      %p113 = por %p111, %p112
      %p114 = scmp.ne.s32.totalorder %s106, %s109
      %p115 = scmp.eq.s32.totalorder %s12, 0
      %p116 = por %p114, %p115
      %p117 = scmp.ne.s32.totalorder %s106, %s109
      %p118 = scmp.eq.s32.totalorder %s17, 1
      %p119 = por %p117, %p118
      %p120 = scmp.ne.s32.totalorder %s109, %s110
      %p121 = scmp.eq.s32.totalorder %s17, 0
      %p122 = por %p120, %p121
      %p123 = scmp.ne.s32.totalorder %s109, %s110
      %p124 = scmp.eq.s32.totalorder %s18, 1
      %p125 = por %p123, %p124
      %p127 = scmp.ne.s32.totalorder %s110, %s126
      %p128 = scmp.eq.s32.totalorder %s18, 0
      %p129 = por %p127, %p128
      %p130 = scmp.le.s32.totalorder 1, %s12
      %p131 = scmp.lt.s32.totalorder %s12, 3
      %p132 = pnand %p130, %p131
      %p133 = pneg %p132
      // Predicated region
      $region9: #{tpu_custom_call.1} parent=5 // pred_check
        _
      $region10: #{tpu_custom_call.1} parent=5 // pred_check_branch
        %135 = sbr.rel (%p132) target = $region12
      $region11: #{tpu_custom_call.1} parent=5 // pred_region
        %s136 = ssub.s32 %s12, 1
        // Predicated region
        $region13: #{tpu_custom_call.1} parent=11 // pred_check
          %p137 = pneg %p73
        $region14: #{tpu_custom_call.1} parent=11 // pred_check_branch
          %139 = sbr.rel (%p137) target = $region16
        $region15: #{tpu_custom_call.1} parent=11 // pred_region
          _
        $region16: #{tpu_custom_call.1} parent=11 // pred_fallthru
          _
        // Predicated region
        $region17: #{tpu_custom_call.1} parent=11 // pred_check
          %p140 = pneg %p94
        $region18: #{tpu_custom_call.1} parent=11 // pred_check_branch
          %142 = sbr.rel (%p140) target = $region20
        $region19: #{tpu_custom_call.1} parent=11 // pred_region
          _
        $region20: #{tpu_custom_call.1} parent=11 // pred_fallthru
          _
      $region12: #{tpu_custom_call.1} parent=5 // pred_fallthru
        _
      %p143 = scmp.lt.s32.totalorder %s12, 2
      // Predicated region
      $region21: #{tpu_custom_call.1} parent=5 // pred_check
        %p144 = pneg %p143
      $region22: #{tpu_custom_call.1} parent=5 // pred_check_branch
        %146 = sbr.rel (%p144) target = $region24
      $region23: #{tpu_custom_call.1} parent=5 // pred_region
        // Predicated region
        $region25: #{tpu_custom_call.1} parent=23 // pred_check
          %p147 = pneg %p46
        $region26: #{tpu_custom_call.1} parent=23 // pred_check_branch
          %149 = sbr.rel (%p147) target = $region28
        $region27: #{tpu_custom_call.1} parent=23 // pred_region
          %s150 = sand.u32 %s36, 1
          %s151 = scalar_lea.sflag [#allocation3], %s150
          %s152 = sand.u32 %s36, 1
          %s153 = smul.addr %s152, 64
          %s154 = scalar_lea.vmem [#allocation2], %s153
          %s155 = smul.u32 2, %s20
          %s157 = ssub.s32 1024, 1024
          %158 = vsyncadd %s151, %s157
          %s159 = smul.addr %s19, 8
          %s160 = sadd.s32 %s155, %s159
          %s161 = smul.addr %s160, 128
          %s162 = scalar_lea.hbm %s0, %s161
          %s163 = sshll.u32 %s154, 4
          %s164 = int_to_ptr.vmem [resolvable:$true] %s163
          %169 = dma.hbm_to_vmem [thread:$0]  %s162, 1024, %s164, %s151, 256, 256, 16
        $region28: #{tpu_custom_call.1} parent=23 // pred_fallthru
          _
      $region24: #{tpu_custom_call.1} parent=5 // pred_fallthru
        _
      %p170 = scmp.le.s32.totalorder 1, %s12
      %p171 = scmp.lt.s32.totalorder %s12, 3
      %p172 = pnand %p170, %p171
      %p173 = pneg %p172
      // Predicated region
      $region29: #{tpu_custom_call.1} parent=5 // pred_check
        _
      $region30: #{tpu_custom_call.1} parent=5 // pred_check_branch
        %175 = sbr.rel (%p172) target = $region32
      $region31: #{tpu_custom_call.1} parent=5 // pred_region
        %s176 = ssub.s32 %s12, 1
        %s177 = sand.u32 %s39, 1
        %s178 = scalar_lea.sflag [#allocation3], %s177
        %s179 = sand.u32 %s39, 1
        %s180 = smul.addr %s179, 64
        %s181 = scalar_lea.vmem [#allocation2], %s180
        // Predicated region
        $region33: #{tpu_custom_call.1} parent=31 // pred_check
          %p182 = pneg %p52
        $region34: #{tpu_custom_call.1} parent=31 // pred_check_branch
          %184 = sbr.rel (%p182) target = $region36
        $region35: #{tpu_custom_call.1} parent=31 // pred_region
          %185 = dma.done %s178, 1024
        $region36: #{tpu_custom_call.1} parent=31 // pred_fallthru
          _
        %s186 = sand.u32 %s39, 1
        %s187 = scalar_lea.sflag [#allocation3], %s186
        %s188 = sand.u32 %s39, 1
        %s189 = smul.addr %s188, 64
        %s190 = scalar_lea.vmem [#allocation2], %s189
        %p191 = pneg %p52
        %p192 = pneg %p49
        %p193 = pneg %p73
        %p194 = pneg %p70
        %p195 = pneg %p94
        %p196 = pneg %p91
        %p197 = pneg %p122
        %p198 = pneg %p119
        %s199 = smul.u32 2, %s22
        %p200 = scmp.lt.s32.totalorder %s21, 1
        %s201 = scalar_select %p200, %s21, 1
        %p202 = scmp.lt.s32.totalorder %s199, 1
        %s203 = scalar_select %p202, %s199, 1
        %s204 = smul.addr %s201, 2
        %s205 = sadd.s32 %s203, %s204
        %s206 = smul.addr %s205, 8
        %s207 = scalar_lea.vmem %s3, %s206
        %s208 = smul.u32 2, %s22
        %s209 = smul.u32 2, %s22
        %p210 = scmp.lt.s32.totalorder %s21, 1
        %s211 = scalar_select %p210, %s21, 1
        %p212 = scmp.lt.s32.totalorder %s209, 1
        %s213 = scalar_select %p212, %s209, 1
        %s214 = smul.addr %s211, 2
        %s215 = sadd.s32 %s213, %s214
        %s216 = smul.addr %s215, 8
        %s217 = scalar_lea.vmem %s3, %s216
        %s218 = smul.u32 2, %s22
        %v219 = vld [vmem:[%s1] sm:$0x3f]
        %v220 = vld [vmem:[%s181] sm:$0xff]
        %v221 = vld [vmem:[%s181 + $0x8] sm:$0xff]
        %v222 = vld [vmem:[%s181 + $0x10] sm:$0xff]
        %v223 = vld [vmem:[%s181 + $0x18] sm:$0xff]
        %v224 = vld [vmem:[%s181 + $0x20] sm:$0xff]
        %v225 = vld [vmem:[%s181 + $0x28] sm:$0xff]
        %v226 = vld [vmem:[%s181 + $0x30] sm:$0xff]
        %v227 = vld [vmem:[%s181 + $0x38] sm:$0xff]
        %v228 = vld [vmem:[%s2] sm:$0x3f]
        %230 = vset.pattern.permute.xlu0 0
        %231 = vperm.xlu0 %230, %v228
        %v232 = vpop.permute.xlu0 %231
        %vm234 = vcmask 261120
        %v236 = vsel %vm234, %v219, 0
        %238 = vmatprep.subr.mxu0 %v221
        %239 = vmatpush1.msra.mxu0 %v220
        %240 = vmatprep.subr.mxu0 %v223
        %241 = vmatpush1.msra.mxu0 %v222
        %242 = vmatprep.subr.mxu0 %v225
        %243 = vmatpush1.msra.mxu0 %v224
        %244 = vmatprep.subr.mxu0 %v227
        %245 = vmatpush1.msra.mxu0 %v226
        %246 = vmatprep.subr.mxu0 0.0
        %247 = vmatpush1.msra.mxu0 0.0
        %248 = vmatprep.subr.mxu0 0.0
        %249 = vmatpush1.msra.mxu0 0.0
        %250 = vmatprep.subr.mxu0 0.0
        %251 = vmatpush1.msra.mxu0 0.0
        %252 = vmatprep.subr.mxu0 0.0
        %253 = vmatpush1.msra.mxu0 0.0
        %254 = vmatprep.subr.mxu0 0.0
        %255 = vmatpush1.msra.mxu0 0.0
        %256 = vmatprep.subr.mxu0 0.0
        %257 = vmatpush1.msra.mxu0 0.0
        %258 = vmatprep.subr.mxu0 0.0
        %259 = vmatpush1.msra.mxu0 0.0
        %260 = vmatprep.subr.mxu0 0.0
        %261 = vmatpush1.msra.mxu0 0.0
        %262 = vmatprep.subr.mxu0 0.0
        %263 = vmatpush1.msra.mxu0 0.0
        %264 = vmatprep.subr.mxu0 0.0
        %265 = vmatpush1.msra.mxu0 0.0
        %266 = vmatprep.subr.mxu0 0.0
        %267 = vmatpush1.msra.mxu0 0.0
        %268 = vmatprep.subr.mxu0 0.0
        %269 = vmatpush1.msra.mxu0 0.0
        %270 = vmatprep.subr.mxu0 0.0
        %271 = vmatpush1.msra.mxu0 0.0
        %272 = vmatprep.subr.mxu0 0.0
        %273 = vmatpush1.msra.mxu0 0.0
        %274 = vmatprep.subr.mxu0 0.0
        %275 = vmatpush1.msra.mxu0 0.0
        %276 = vmatprep.subr.mxu0 0.0
        %277 = vmatpush1.msra.mxu0 0.0
        %278 = vmatprep.subr.mxu0 0.0
        %279 = vmatpush1.msra.mxu0 0.0
        %280 = vmatprep.subr.mxu0 0.0
        %281 = vmatpush1.msra.mxu0 0.0
        %282 = vmatprep.subr.mxu0 0.0
        %283 = vmatpush1.msra.mxu0 0.0
        %284 = vmatprep.subr.mxu0 0.0
        %285 = vmatpush1.msra.mxu0 0.0
        %286 = vmatprep.subr.mxu0 0.0
        %287 = vmatpush1.msra.mxu0 0.0
        %288 = vmatprep.subr.mxu0 0.0
        %289 = vmatpush1.msra.mxu0 0.0
        %290 = vmatprep.subr.mxu0 0.0
        %291 = vmatpush1.msra.mxu0 0.0
        %292 = vmatprep.subr.mxu0 0.0
        %293 = vmatpush1.msra.mxu0 0.0
        %294 = vmatprep.subr.mxu0 0.0
        %295 = vmatpush1.msra.mxu0 0.0
        %296 = vmatprep.subr.mxu0 0.0
        %297 = vmatpush1.msra.mxu0 0.0
        %298 = vmatprep.subr.mxu0 0.0
        %299 = vmatpush1.msra.mxu0 0.0
        %300 = vmatprep.subr.mxu0 0.0
        %301 = vmatpush1.msra.mxu0 0.0
        %302 = vmatprep.mubr.f32.mxu0 0.0
        %303 = vmatmul.mubr.f32.gmra.mrb[0].mxu0 %v236
        %v304 = vpop.f32.mrb[0].mxu0
        %v305 = vadd.f32 %v232, %v304
        %v306 = vpop.f32.mrb[0].mxu0
        %v307 = vadd.f32 %v232, %v306
        %308 = vdwg.mxu0
        %309 = vst [vmem:[%s217] sm:$0x3f] %v305
        %310 = vst [vmem:[%s217 + $0x8] sm:$0x3f] %v307
        %s311 = smul.u32 2, %s22
        %p312 = scmp.lt.s32.totalorder %s21, 1
        %s313 = scalar_select %p312, %s21, 1
        %p314 = scmp.lt.s32.totalorder %s311, 1
        %s315 = scalar_select %p314, %s311, 1
        %s316 = smul.addr %s313, 2
        %s317 = sadd.s32 %s315, %s316
        %s318 = smul.addr %s317, 8
        %s319 = scalar_lea.vmem %s3, %s318
        // Predicated region
        $region37: #{tpu_custom_call.1} parent=31 // pred_check
          %p320 = pneg %p119
        $region38: #{tpu_custom_call.1} parent=31 // pred_check_branch
          %322 = sbr.rel (%p320) target = $region40
        $region39: #{tpu_custom_call.1} parent=31 // pred_region
          %s323 = smul.u32 2, %s22
        $region40: #{tpu_custom_call.1} parent=31 // pred_fallthru
          _
      $region32: #{tpu_custom_call.1} parent=5 // pred_fallthru
        _
      %p324 = scmp.le.s32.totalorder 2, %s12
      // Predicated region
      $region41: #{tpu_custom_call.1} parent=5 // pred_check
        %p325 = pneg %p324
      $region42: #{tpu_custom_call.1} parent=5 // pred_check_branch
        %327 = sbr.rel (%p325) target = $region44
      $region43: #{tpu_custom_call.1} parent=5 // pred_region
        %s328 = ssub.s32 %s12, 2
        // Predicated region
        $region45: #{tpu_custom_call.1} parent=43 // pred_check
          %p329 = pneg %p125
        $region46: #{tpu_custom_call.1} parent=43 // pred_check_branch
          %331 = sbr.rel (%p329) target = $region48
        $region47: #{tpu_custom_call.1} parent=43 // pred_region
          %s332 = smul.u32 2, %s24
          %p333 = scmp.lt.s32.totalorder %s23, 1
          %s334 = scalar_select %p333, %s23, 1
          %p335 = scmp.lt.s32.totalorder %s332, 1
          %s336 = scalar_select %p335, %s332, 1
          %s337 = smul.addr %s334, 2
          %s338 = sadd.s32 %s336, %s337
          %s339 = smul.addr %s338, 8
          %s340 = scalar_lea.vmem %s3, %s339
        $region48: #{tpu_custom_call.1} parent=43 // pred_fallthru
          _
      $region44: #{tpu_custom_call.1} parent=5 // pred_fallthru
        _
    $region6: #{tpu_custom_call.1} parent=1 // loop_footer
      %s16 = sadd.s32 1, %s12
    $region7: #{tpu_custom_call.1} parent=1 // loop_footer_branch
      %11 = sbr.rel target = $region3
    $region8: #{tpu_custom_call.1} parent=1 // loop_exit
      _
    %341 = vsyncpa [#allocation3], 1
    %s342 = scalar_lea.sflag [#allocation3], 1
    %343 = vsyncpa %s342, 1

</llo_original>
